<compile_context>
chip_gen: v5e
topology: v5e:2x2
jax: 0.10.0
libtpu: 0.0.40
codegen_flags: <defaults>
</compile_context>

<pallas_src>
import functools

import jax
import jax.numpy as jnp
from jax.experimental import pallas as pl
from jax.experimental.pallas import tpu as pltpu

_LANE = 128     # lane width: last dim padded to this for unmasked stores / MXU use
_SUBLANE = 8    # fp32 sublane granularity for the batch tile


def _round_up(x, m):
    return ((x + m - 1) // m) * m


def _fused_mlp_kernel(x_ref, w_ref, b_ref, o_ref, *, n_layers):
    """Entire Linear chain fused; activation stays in VMEM/vregs between layers."""
    h = x_ref[...]
    # n_layers is a small compile-time constant -> static unroll keeps every
    # matmul visible to the scheduler and avoids dynamic weight indexing.
    for l in range(n_layers):
        h = jnp.dot(h, w_ref[l], preferred_element_type=jnp.float32) + b_ref[l]
    o_ref[...] = h.astype(o_ref.dtype)


def nn2_forward(params, x, *, block_b=128):
    """Fused NN2 forward.

    params: list of (w, b), w:(fin, fout), b:(1, fout).
    x:      (B, in_N) float32.
    Returns (B, out_N).
    """
    n_layers = len(params)
    in_n = params[0][0].shape[0]
    out_n = params[-1][0].shape[1]
    assert x.shape[1] == in_n

    # Common lane-dense padded feature width for every layer.
    feat = max([in_n] + [w.shape[1] for w, _ in params])
    F = _round_up(feat, _LANE)

    B = x.shape[0]
    TB = _round_up(min(block_b, _round_up(B, _SUBLANE)), _SUBLANE)
    B_pad = _round_up(B, TB)

    # Zero-pad & stack parameters (exact: padded weight rows/cols only multiply
    # zero activations, padded bias lanes are zero).
    w_stack = jnp.stack(
        [jnp.pad(w, ((0, F - w.shape[0]), (0, F - w.shape[1]))) for w, _ in params]
    )                                                          # (L, F, F)
    b_stack = jnp.stack(
        [jnp.pad(b, ((0, 0), (0, F - b.shape[1]))) for _, b in params]
    )                                                          # (L, 1, F)
    x_pad = jnp.pad(x, ((0, B_pad - B), (0, F - in_n)))        # (B_pad, F)

    kernel = functools.partial(_fused_mlp_kernel, n_layers=n_layers)

    itemsize = 4  # fp32
    flops = 2 * B_pad * F * F * n_layers
    bytes_accessed = (
        x_pad.size + w_stack.size + b_stack.size + B_pad * F
    ) * itemsize

    out_pad = pl.pallas_call(
        kernel,
        out_shape=jax.ShapeDtypeStruct((B_pad, F), x.dtype),
        grid_spec=pltpu.PrefetchScalarGridSpec(
            num_scalar_prefetch=0,
            grid=(B_pad // TB,),
            in_specs=[
                # Activations: tiled over batch, auto double-buffered.
                pl.BlockSpec((TB, F), lambda i: (i, 0)),
                # Weights / biases: same block every grid step -> VMEM-resident.
                pl.BlockSpec((n_layers, F, F), lambda i: (0, 0, 0)),
                pl.BlockSpec((n_layers, 1, F), lambda i: (0, 0, 0)),
            ],
            out_specs=pl.BlockSpec((TB, F), lambda i: (i, 0)),
        ),
        compiler_params=pltpu.CompilerParams(
            dimension_semantics=("parallel",),
        ),
        cost_estimate=pl.CostEstimate(
            flops=flops, transcendentals=0, bytes_accessed=bytes_accessed
        ),
    )(x_pad, w_stack, b_stack)

    return out_pad[:B, :out_n]


def init_nn2_params(key, in_N, width, depth, out_N):
    """Deterministic PyTorch-style init: U(-1/sqrt(fan_in), 1/sqrt(fan_in))."""
    dims = [(in_N, width)] + [(width, width)] * depth + [(width, out_N)]
    params = []
    for (fin, fout) in dims:
        key, kw, kb = jax.random.split(key, 3)
        bound = 1.0 / jnp.sqrt(jnp.float32(fin))
        w = jax.random.uniform(kw, (fin, fout), jnp.float32, -bound, bound)
        b = jax.random.uniform(kb, (1, fout), jnp.float32, -bound, bound)
        params.append((w, b))
    return params


def nn2_reference(params, x):
    for w, b in params:
        x = x @ w + b
    return x


if __name__ == "__main__":
    in_N, width, depth, out_N = 4, 32, 2, 3
    batch = 8

    key = jax.random.PRNGKey(0)
    key, kx = jax.random.split(key)
    x = jax.random.normal(kx, (batch, in_N), jnp.float32)

    params = init_nn2_params(key, in_N, width, depth, out_N)

    out = nn2_forward(params, x)
    out = jax.block_until_ready(out)

    ref = nn2_reference(params, x)
    assert out.shape == (batch, out_N)
    assert jnp.allclose(out, ref, atol=1e-4, rtol=1e-4), float(
        jnp.max(jnp.abs(out - ref))
    )

    print("KERNEL_OK")
</pallas_src>

<mosaic_0001>
module attributes {stable_mosaic.version = 11 : i64} {
  func.func @_fused_mlp_kernel(%arg0: i32, %arg1: memref<8x128xf32, #tpu.memory_space<vmem>>, %arg2: memref<4x128x128xf32, #tpu.memory_space<vmem>>, %arg3: memref<4x1x128xf32, #tpu.memory_space<vmem>>, %arg4: memref<8x128xf32, #tpu.memory_space<vmem>>) attributes {dimension_semantics = [#tpu.dimension_semantics<parallel>], iteration_bounds = array<i64: 1>, scalar_prefetch = 0 : i64, scratch_operands = 0 : i64, tpu.core_type = #tpu.core_type<tc>, window_params = [{transform_indices = @transform_0, window_bounds = array<i64: 8, 128>}, {pipeline_mode = #tpu.pipeline_mode<synchronous>, transform_indices = @transform_1, window_bounds = array<i64: 4, 128, 128>}, {pipeline_mode = #tpu.pipeline_mode<synchronous>, transform_indices = @transform_2, window_bounds = array<i64: 4, 1, 128>}, {transform_indices = @transform_3, window_bounds = array<i64: 8, 128>}]} {
    %c0 = arith.constant 0 : index
    %c0_0 = arith.constant 0 : index
    %0 = vector.load %arg1[%c0, %c0_0] : memref<8x128xf32, #tpu.memory_space<vmem>>, vector<8x128xf32>
    %c0_1 = arith.constant 0 : index
    %c0_2 = arith.constant 0 : index
    %c0_3 = arith.constant 0 : index
    %1 = vector.load %arg2[%c0_1, %c0_2, %c0_3] : memref<4x128x128xf32, #tpu.memory_space<vmem>>, vector<1x128x128xf32>
    %2 = vector.shape_cast %1 : vector<1x128x128xf32> to vector<128x128xf32>
    %cst = arith.constant dense<0.000000e+00> : vector<8x128xf32>
    %3 = tpu.matmul %0, %2, %cst {dimension_numbers = #tpu.dot_dimension_numbers<[1], [0], [0], [1], [0, 0, 1, 1], [], []>} : vector<8x128xf32>, vector<128x128xf32>, vector<8x128xf32> -> vector<8x128xf32>
    %c0_4 = arith.constant 0 : index
    %c0_5 = arith.constant 0 : index
    %c0_6 = arith.constant 0 : index
    %4 = vector.load %arg3[%c0_4, %c0_5, %c0_6] : memref<4x1x128xf32, #tpu.memory_space<vmem>>, vector<1x1x128xf32>
    %5 = vector.shape_cast %4 : vector<1x1x128xf32> to vector<1x128xf32>
    %6 = vector.broadcast %5 : vector<1x128xf32> to vector<8x128xf32>
    %7 = arith.addf %3, %6 : vector<8x128xf32>
    %c1 = arith.constant 1 : index
    %c0_7 = arith.constant 0 : index
    %c0_8 = arith.constant 0 : index
    %8 = vector.load %arg2[%c1, %c0_7, %c0_8] : memref<4x128x128xf32, #tpu.memory_space<vmem>>, vector<1x128x128xf32>
    %9 = vector.shape_cast %8 : vector<1x128x128xf32> to vector<128x128xf32>
    %cst_9 = arith.constant dense<0.000000e+00> : vector<8x128xf32>
    %10 = tpu.matmul %7, %9, %cst_9 {dimension_numbers = #tpu.dot_dimension_numbers<[1], [0], [0], [1], [0, 0, 1, 1], [], []>} : vector<8x128xf32>, vector<128x128xf32>, vector<8x128xf32> -> vector<8x128xf32>
    %c1_10 = arith.constant 1 : index
    %c0_11 = arith.constant 0 : index
    %c0_12 = arith.constant 0 : index
    %11 = vector.load %arg3[%c1_10, %c0_11, %c0_12] : memref<4x1x128xf32, #tpu.memory_space<vmem>>, vector<1x1x128xf32>
    %12 = vector.shape_cast %11 : vector<1x1x128xf32> to vector<1x128xf32>
    %13 = vector.broadcast %12 : vector<1x128xf32> to vector<8x128xf32>
    %14 = arith.addf %10, %13 : vector<8x128xf32>
    %c2 = arith.constant 2 : index
    %c0_13 = arith.constant 0 : index
    %c0_14 = arith.constant 0 : index
    %15 = vector.load %arg2[%c2, %c0_13, %c0_14] : memref<4x128x128xf32, #tpu.memory_space<vmem>>, vector<1x128x128xf32>
    %16 = vector.shape_cast %15 : vector<1x128x128xf32> to vector<128x128xf32>
    %cst_15 = arith.constant dense<0.000000e+00> : vector<8x128xf32>
    %17 = tpu.matmul %14, %16, %cst_15 {dimension_numbers = #tpu.dot_dimension_numbers<[1], [0], [0], [1], [0, 0, 1, 1], [], []>} : vector<8x128xf32>, vector<128x128xf32>, vector<8x128xf32> -> vector<8x128xf32>
    %c2_16 = arith.constant 2 : index
    %c0_17 = arith.constant 0 : index
    %c0_18 = arith.constant 0 : index
    %18 = vector.load %arg3[%c2_16, %c0_17, %c0_18] : memref<4x1x128xf32, #tpu.memory_space<vmem>>, vector<1x1x128xf32>
    %19 = vector.shape_cast %18 : vector<1x1x128xf32> to vector<1x128xf32>
    %20 = vector.broadcast %19 : vector<1x128xf32> to vector<8x128xf32>
    %21 = arith.addf %17, %20 : vector<8x128xf32>
    %c3 = arith.constant 3 : index
    %c0_19 = arith.constant 0 : index
    %c0_20 = arith.constant 0 : index
    %22 = vector.load %arg2[%c3, %c0_19, %c0_20] : memref<4x128x128xf32, #tpu.memory_space<vmem>>, vector<1x128x128xf32>
    %23 = vector.shape_cast %22 : vector<1x128x128xf32> to vector<128x128xf32>
    %cst_21 = arith.constant dense<0.000000e+00> : vector<8x128xf32>
    %24 = tpu.matmul %21, %23, %cst_21 {dimension_numbers = #tpu.dot_dimension_numbers<[1], [0], [0], [1], [0, 0, 1, 1], [], []>} : vector<8x128xf32>, vector<128x128xf32>, vector<8x128xf32> -> vector<8x128xf32>
    %c3_22 = arith.constant 3 : index
    %c0_23 = arith.constant 0 : index
    %c0_24 = arith.constant 0 : index
    %25 = vector.load %arg3[%c3_22, %c0_23, %c0_24] : memref<4x1x128xf32, #tpu.memory_space<vmem>>, vector<1x1x128xf32>
    %26 = vector.shape_cast %25 : vector<1x1x128xf32> to vector<1x128xf32>
    %27 = vector.broadcast %26 : vector<1x128xf32> to vector<8x128xf32>
    %28 = arith.addf %24, %27 : vector<8x128xf32>
    %c0_25 = arith.constant 0 : index
    %c0_26 = arith.constant 0 : index
    %29 = vector.load %arg4[%c0_25, %c0_26] : memref<8x128xf32, #tpu.memory_space<vmem>>, vector<8x128xf32>
    tpu.vector_store %arg4[%c0_25, %c0_26], %28 {strides = array<i32>} : memref<8x128xf32, #tpu.memory_space<vmem>>, vector<8x128xf32>,
    return
  }
  func.func @transform_0(%arg0: i32) -> (i32, i32) {
    %c0_i32 = arith.constant 0 : i32
    %c0_i32_0 = arith.constant 0 : i32
    return %arg0, %c0_i32 : i32, i32
  }
  func.func @transform_1(%arg0: i32) -> (i32, i32, i32) {
    %c0_i32 = arith.constant 0 : i32
    %c0_i32_0 = arith.constant 0 : i32
    %c0_i32_1 = arith.constant 0 : i32
    %c0_i32_2 = arith.constant 0 : i32
    return %c0_i32, %c0_i32_0, %c0_i32_1 : i32, i32, i32
  }
  func.func @transform_2(%arg0: i32) -> (i32, i32, i32) {
    %c0_i32 = arith.constant 0 : i32
    %c0_i32_0 = arith.constant 0 : i32
    %c0_i32_1 = arith.constant 0 : i32
    %c0_i32_2 = arith.constant 0 : i32
    return %c0_i32, %c0_i32_0, %c0_i32_1 : i32, i32, i32
  }
  func.func @transform_3(%arg0: i32) -> (i32, i32) {
    %c0_i32 = arith.constant 0 : i32
    %c0_i32_0 = arith.constant 0 : i32
    return %arg0, %c0_i32 : i32, i32
  }
}

</mosaic_0001>

<llo_original>
// kernel: tpu_custom_call.1
$region0: #{tpu_custom_call.1}
  #allocation0 [shape = 'u32[]', space=smem, size = 0x4, offset = 0x4, fixed_abs, tag = 'smem constant byte address 0x4 - core index']
  #allocation1 [shape = 'u32[72,128]{1,0:T(1,128)}', space=vmem, size = 0x9000, scoped, tag = 'internal scratch']
  %s0 = inlined_call_operand.hbm [shape: f32[8,128], index: 0, kind: input, shape index: {}]
  %s1 = inlined_call_operand.hbm [shape: f32[4,128,128], index: 1, kind: input, shape index: {}]
  %s2 = inlined_call_operand.hbm [shape: f32[4,1,128], index: 2, kind: input, shape index: {}]
  %s3 = inlined_call_operand.hbm [shape: f32[8,128], index: 3, kind: output, shape index: {}]
  %s4 = sld [smem:[#allocation0]]
  $region34: #{tpu_custom_call.1} parent=0
    _
  %s6 = ssub.s32 1, %s4
  %s7 = scalar_select 0, %s6, %s4
  $region1: #{tpu_custom_call.1} parent=0
    #allocation2 [shape = 'u8[4096]{0}', space=vmem, size = 0x1000, scoped, tag = 'input window, operand 0, single buffered']
    #allocation3 [shape = 's32[1]{0}', space=sflag, size = 0x4, scoped, tag = 'scoped memory for tpu_custom_call.1']
    #allocation4 [shape = 's32[1]{0}', space=sflag, size = 0x4, scoped, tag = 'scoped memory for tpu_custom_call.1']
    #allocation5 [shape = 'u8[262144]{0}', space=vmem, size = 0x40000, scoped, tag = 'input window, operand 1, single buffered']
    #allocation6 [shape = 's32[1]{0}', space=sflag, size = 0x4, scoped, tag = 'scoped memory for tpu_custom_call.1']
    #allocation7 [shape = 'u8[2048]{0}', space=vmem, size = 0x800, scoped, tag = 'input window, operand 2, single buffered']
    #allocation8 [shape = 'u8[4096]{0}', space=vmem, size = 0x1000, scoped, tag = 'output window, operand 0, single buffered']
    %8 = vsyncpa [#allocation3], 0
    %9 = vsyncpa [#allocation6], 0
    %10 = vsyncpa [#allocation4], 0
    // Predicated region
    $region2: #{tpu_custom_call.1} parent=1 // pred_check
      _
    $region3: #{tpu_custom_call.1} parent=1 // pred_check_branch
      %12 = sbr.rel (0) target = $region5
    $region4: #{tpu_custom_call.1} parent=1 // pred_region
      %14 = vsyncadd [#allocation3], 0
      %s16 = sshll.u32 %s0, 4
      %s17 = int_to_ptr.hbm [resolvable:$true] %s16
      %s18 = sshll.u32 [#allocation2], 4
      %s19 = int_to_ptr.vmem [resolvable:$true] %s18
      %21 = dma.hbm_to_vmem [thread:$0]  %s17, 128, %s19, [#allocation3]
    $region5: #{tpu_custom_call.1} parent=1 // pred_fallthru
      _
    // Predicated region
    $region6: #{tpu_custom_call.1} parent=1 // pred_check
      _
    $region7: #{tpu_custom_call.1} parent=1 // pred_check_branch
      %23 = sbr.rel (0) target = $region9
    $region8: #{tpu_custom_call.1} parent=1 // pred_region
      %25 = vsyncadd [#allocation6], 0
      %s26 = sshll.u32 %s1, 4
      %s27 = int_to_ptr.hbm [resolvable:$true] %s26
      %s28 = sshll.u32 [#allocation5], 4
      %s29 = int_to_ptr.vmem [resolvable:$true] %s28
      %34 = dma.hbm_to_vmem [thread:$0]  %s27, 8192, %s29, [#allocation6], 128, 128, 8
    $region9: #{tpu_custom_call.1} parent=1 // pred_fallthru
      _
    // Predicated region
    $region10: #{tpu_custom_call.1} parent=1 // pred_check
      _
    $region11: #{tpu_custom_call.1} parent=1 // pred_check_branch
      %36 = sbr.rel (0) target = $region13
    $region12: #{tpu_custom_call.1} parent=1 // pred_region
      %38 = vsyncadd [#allocation6], 0
      %s39 = sshll.u32 %s2, 4
      %s40 = int_to_ptr.hbm [resolvable:$true] %s39
      %s41 = sshll.u32 [#allocation7], 4
      %s42 = int_to_ptr.vmem [resolvable:$true] %s41
      %47 = dma.hbm_to_vmem [thread:$0]  %s40, 64, %s42, [#allocation6], 16, 16, 1
    $region13: #{tpu_custom_call.1} parent=1 // pred_fallthru
      _
    // Predicated region
    $region14: #{tpu_custom_call.1} parent=1 // pred_check
      _
    $region15: #{tpu_custom_call.1} parent=1 // pred_check_branch
      %49 = sbr.rel (0) target = $region17
    $region16: #{tpu_custom_call.1} parent=1 // pred_region
      %51 = dma.done [#allocation3], 128
    $region17: #{tpu_custom_call.1} parent=1 // pred_fallthru
      _
    // Predicated region
    $region18: #{tpu_custom_call.1} parent=1 // pred_check
      _
    $region19: #{tpu_custom_call.1} parent=1 // pred_check_branch
      %53 = sbr.rel (0) target = $region21
    $region20: #{tpu_custom_call.1} parent=1 // pred_region
      %55 = dma.done [#allocation6], 8192
    $region21: #{tpu_custom_call.1} parent=1 // pred_fallthru
      _
    // Predicated region
    $region22: #{tpu_custom_call.1} parent=1 // pred_check
      _
    $region23: #{tpu_custom_call.1} parent=1 // pred_check_branch
      %57 = sbr.rel (0) target = $region25
    $region24: #{tpu_custom_call.1} parent=1 // pred_region
      %59 = dma.done [#allocation6], 64
    $region25: #{tpu_custom_call.1} parent=1 // pred_fallthru
      _
    %v60 = vld [vmem:[#allocation2] sm:$0xff]
    %v61 = vld [vmem:[#allocation5] sm:$0xff]
    %v62 = vld [vmem:[#allocation5 + $0x8] sm:$0xff]
    %v63 = vld [vmem:[#allocation5 + $0x10] sm:$0xff]
    %v64 = vld [vmem:[#allocation5 + $0x18] sm:$0xff]
    %v65 = vld [vmem:[#allocation5 + $0x20] sm:$0xff]
    %v66 = vld [vmem:[#allocation5 + $0x28] sm:$0xff]
    %v67 = vld [vmem:[#allocation5 + $0x30] sm:$0xff]
    %v68 = vld [vmem:[#allocation5 + $0x38] sm:$0xff]
    %v69 = vld [vmem:[#allocation5 + $0x40] sm:$0xff]
    %v70 = vld [vmem:[#allocation5 + $0x48] sm:$0xff]
    %v71 = vld [vmem:[#allocation5 + $0x50] sm:$0xff]
    %v72 = vld [vmem:[#allocation5 + $0x58] sm:$0xff]
    %v73 = vld [vmem:[#allocation5 + $0x60] sm:$0xff]
    %v74 = vld [vmem:[#allocation5 + $0x68] sm:$0xff]
    %v75 = vld [vmem:[#allocation5 + $0x70] sm:$0xff]
    %v76 = vld [vmem:[#allocation5 + $0x78] sm:$0xff]
    %v77 = vld [vmem:[#allocation7] sm:$0x1]
    %v79 = vperm.slane %v77, 0
    %81 = vmatpush.msra.mxu0 %v76
    %82 = vmatpush.msra.mxu0 %v75
    %83 = vmatpush.msra.mxu0 %v74
    %84 = vmatpush.msra.mxu0 %v73
    %85 = vmatpush.msra.mxu0 %v72
    %86 = vmatpush.msra.mxu0 %v71
    %87 = vmatpush.msra.mxu0 %v70
    %88 = vmatpush.msra.mxu0 %v69
    %89 = vmatpush.msra.mxu0 %v68
    %90 = vmatpush.msra.mxu0 %v67
    %91 = vmatpush.msra.mxu0 %v66
    %92 = vmatpush.msra.mxu0 %v65
    %93 = vmatpush.msra.mxu0 %v64
    %94 = vmatpush.msra.mxu0 %v63
    %95 = vmatpush.msra.mxu0 %v62
    %96 = vmatpush.msra.mxu0 %v61
    %97 = vmatmul.f32.gmra.mxu0 %v60
    %v98 = vpop.f32.mrf.mxu0
    %v99 = vadd.f32 %v79, %v98
    %100 = vdwg.mxu0
    %s101 = scalar_lea.vmem [#allocation5], 128
    %v102 = vld [vmem:[%s101] sm:$0xff]
    %v103 = vld [vmem:[%s101 + $0x8] sm:$0xff]
    %v104 = vld [vmem:[%s101 + $0x10] sm:$0xff]
    %v105 = vld [vmem:[%s101 + $0x18] sm:$0xff]
    %v106 = vld [vmem:[%s101 + $0x20] sm:$0xff]
    %v107 = vld [vmem:[%s101 + $0x28] sm:$0xff]
    %v108 = vld [vmem:[%s101 + $0x30] sm:$0xff]
    %v109 = vld [vmem:[%s101 + $0x38] sm:$0xff]
    %v110 = vld [vmem:[%s101 + $0x40] sm:$0xff]
    %v111 = vld [vmem:[%s101 + $0x48] sm:$0xff]
    %v112 = vld [vmem:[%s101 + $0x50] sm:$0xff]
    %v113 = vld [vmem:[%s101 + $0x58] sm:$0xff]
    %v114 = vld [vmem:[%s101 + $0x60] sm:$0xff]
    %v115 = vld [vmem:[%s101 + $0x68] sm:$0xff]
    %v116 = vld [vmem:[%s101 + $0x70] sm:$0xff]
    %v117 = vld [vmem:[%s101 + $0x78] sm:$0xff]
    %s118 = scalar_lea.vmem [#allocation7], 1
    %v119 = vld [vmem:[%s118] sm:$0x1]
    %v121 = vperm.slane %v119, 0
    %123 = vmatpush.msra.mxu0 %v117
    %124 = vmatpush.msra.mxu0 %v116
    %125 = vmatpush.msra.mxu0 %v115
    %126 = vmatpush.msra.mxu0 %v114
    %127 = vmatpush.msra.mxu0 %v113
    %128 = vmatpush.msra.mxu0 %v112
    %129 = vmatpush.msra.mxu0 %v111
    %130 = vmatpush.msra.mxu0 %v110
    %131 = vmatpush.msra.mxu0 %v109
    %132 = vmatpush.msra.mxu0 %v108
    %133 = vmatpush.msra.mxu0 %v107
    %134 = vmatpush.msra.mxu0 %v106
    %135 = vmatpush.msra.mxu0 %v105
    %136 = vmatpush.msra.mxu0 %v104
    %137 = vmatpush.msra.mxu0 %v103
    %138 = vmatpush.msra.mxu0 %v102
    %139 = vmatmul.f32.gmra.mxu0 %v99
    %v140 = vpop.f32.mrf.mxu0
    %v141 = vadd.f32 %v121, %v140
    %142 = vdwg.mxu0
    %s143 = scalar_lea.vmem [#allocation5], 256
    %v144 = vld [vmem:[%s143] sm:$0xff]
    %v145 = vld [vmem:[%s143 + $0x8] sm:$0xff]
    %v146 = vld [vmem:[%s143 + $0x10] sm:$0xff]
    %v147 = vld [vmem:[%s143 + $0x18] sm:$0xff]
    %v148 = vld [vmem:[%s143 + $0x20] sm:$0xff]
    %v149 = vld [vmem:[%s143 + $0x28] sm:$0xff]
    %v150 = vld [vmem:[%s143 + $0x30] sm:$0xff]
    %v151 = vld [vmem:[%s143 + $0x38] sm:$0xff]
    %v152 = vld [vmem:[%s143 + $0x40] sm:$0xff]
    %v153 = vld [vmem:[%s143 + $0x48] sm:$0xff]
    %v154 = vld [vmem:[%s143 + $0x50] sm:$0xff]
    %v155 = vld [vmem:[%s143 + $0x58] sm:$0xff]
    %v156 = vld [vmem:[%s143 + $0x60] sm:$0xff]
    %v157 = vld [vmem:[%s143 + $0x68] sm:$0xff]
    %v158 = vld [vmem:[%s143 + $0x70] sm:$0xff]
    %v159 = vld [vmem:[%s143 + $0x78] sm:$0xff]
    %s160 = scalar_lea.vmem [#allocation7], 2
    %v161 = vld [vmem:[%s160] sm:$0x1]
    %v163 = vperm.slane %v161, 0
    %165 = vmatpush.msra.mxu0 %v159
    %166 = vmatpush.msra.mxu0 %v158
    %167 = vmatpush.msra.mxu0 %v157
    %168 = vmatpush.msra.mxu0 %v156
    %169 = vmatpush.msra.mxu0 %v155
    %170 = vmatpush.msra.mxu0 %v154
    %171 = vmatpush.msra.mxu0 %v153
    %172 = vmatpush.msra.mxu0 %v152
    %173 = vmatpush.msra.mxu0 %v151
    %174 = vmatpush.msra.mxu0 %v150
    %175 = vmatpush.msra.mxu0 %v149
    %176 = vmatpush.msra.mxu0 %v148
    %177 = vmatpush.msra.mxu0 %v147
    %178 = vmatpush.msra.mxu0 %v146
    %179 = vmatpush.msra.mxu0 %v145
    %180 = vmatpush.msra.mxu0 %v144
    %181 = vmatmul.f32.gmra.mxu0 %v141
    %v182 = vpop.f32.mrf.mxu0
    %v183 = vadd.f32 %v163, %v182
    %184 = vdwg.mxu0
    %s185 = scalar_lea.vmem [#allocation5], 384
    %v186 = vld [vmem:[%s185] sm:$0xff]
    %v187 = vld [vmem:[%s185 + $0x8] sm:$0xff]
    %v188 = vld [vmem:[%s185 + $0x10] sm:$0xff]
    %v189 = vld [vmem:[%s185 + $0x18] sm:$0xff]
    %v190 = vld [vmem:[%s185 + $0x20] sm:$0xff]
    %v191 = vld [vmem:[%s185 + $0x28] sm:$0xff]
    %v192 = vld [vmem:[%s185 + $0x30] sm:$0xff]
    %v193 = vld [vmem:[%s185 + $0x38] sm:$0xff]
    %v194 = vld [vmem:[%s185 + $0x40] sm:$0xff]
    %v195 = vld [vmem:[%s185 + $0x48] sm:$0xff]
    %v196 = vld [vmem:[%s185 + $0x50] sm:$0xff]
    %v197 = vld [vmem:[%s185 + $0x58] sm:$0xff]
    %v198 = vld [vmem:[%s185 + $0x60] sm:$0xff]
    %v199 = vld [vmem:[%s185 + $0x68] sm:$0xff]
    %v200 = vld [vmem:[%s185 + $0x70] sm:$0xff]
    %v201 = vld [vmem:[%s185 + $0x78] sm:$0xff]
    %s202 = scalar_lea.vmem [#allocation7], 3
    %v203 = vld [vmem:[%s202] sm:$0x1]
    %v205 = vperm.slane %v203, 0
    %207 = vmatpush.msra.mxu0 %v201
    %208 = vmatpush.msra.mxu0 %v200
    %209 = vmatpush.msra.mxu0 %v199
    %210 = vmatpush.msra.mxu0 %v198
    %211 = vmatpush.msra.mxu0 %v197
    %212 = vmatpush.msra.mxu0 %v196
    %213 = vmatpush.msra.mxu0 %v195
    %214 = vmatpush.msra.mxu0 %v194
    %215 = vmatpush.msra.mxu0 %v193
    %216 = vmatpush.msra.mxu0 %v192
    %217 = vmatpush.msra.mxu0 %v191
    %218 = vmatpush.msra.mxu0 %v190
    %219 = vmatpush.msra.mxu0 %v189
    %220 = vmatpush.msra.mxu0 %v188
    %221 = vmatpush.msra.mxu0 %v187
    %222 = vmatpush.msra.mxu0 %v186
    %223 = vmatmul.f32.gmra.mxu0 %v183
    %v224 = vpop.f32.mrf.mxu0
    %v225 = vadd.f32 %v205, %v224
    %226 = vdwg.mxu0
    %227 = vst [vmem:[#allocation8] sm:$0xff] %v225
    // Predicated region
    $region26: #{tpu_custom_call.1} parent=1 // pred_check
      _
    $region27: #{tpu_custom_call.1} parent=1 // pred_check_branch
      %229 = sbr.rel (0) target = $region29
    $region28: #{tpu_custom_call.1} parent=1 // pred_region
      %231 = vsyncadd [#allocation4], 0
      %s233 = sshll.u32 [#allocation8], 4
      %s234 = int_to_ptr.vmem [resolvable:$true] %s233
      %s235 = sshll.u32 %s3, 4
      %s236 = int_to_ptr.hbm [resolvable:$true] %s235
      %238 = dma.vmem_to_hbm [thread:$0]  %s234, 128, %s236, [#allocation4]
    $region29: #{tpu_custom_call.1} parent=1 // pred_fallthru
      _
    // Predicated region
    $region30: #{tpu_custom_call.1} parent=1 // pred_check
      _
    $region31: #{tpu_custom_call.1} parent=1 // pred_check_branch
      %240 = sbr.rel (0) target = $region33
    $region32: #{tpu_custom_call.1} parent=1 // pred_region
      %242 = dma.done [#allocation4], 128
    $region33: #{tpu_custom_call.1} parent=1 // pred_fallthru
      _
    %243 = vsyncpa [#allocation3], 1
    %244 = vsyncpa [#allocation6], 1
    %245 = vsyncpa [#allocation4], 1

</llo_original>
